<compile_context>
chip_gen: v7x
topology: tpu7x:2x2x1
jax: 0.10.0
libtpu: 0.0.40
codegen_flags: <defaults>
</compile_context>

<pallas_src>
import functools

import jax
import jax.numpy as jnp
from jax import lax
from jax.experimental import pallas as pl
from jax.experimental.pallas import tpu as pltpu

KSIZE = 3  # conv2 kernel size (static)


def bottleneck_kernel(x_ref, w1_ref, w3_ref, b3_ref, w2_ref, scal_ref,
                      out_ref, xk_ref, *, true_l, ksize):
    # x_ref: (NB, C, LP) VMEM.  w1/w3/b3: (C, 1) VMEM (BN scales pre-folded).
    # w2_ref: (ksize,) SMEM taps (BN2 scale folded).
    # scal_ref: (2,) SMEM = [bn1_shift, conv2_bias + bn2_shift].
    nb, c, lp = x_ref.shape

    # conv1: 1x1, C -> 1, no bias (BN1 scale folded into w1) + bn1 shift + relu.
    y = jnp.sum(x_ref[...] * w1_ref[...][None, :, :], axis=1, keepdims=True)  # (NB,1,LP)
    y = jnp.maximum(y + scal_ref[0], 0.0)

    idx = lax.broadcasted_iota(jnp.int32, (1, 1, lp), 2)
    if lp != true_l:
        # Lane tail [true_l, LP) of the overhanging input block holds
        # unspecified padding; zero it so it can never leak (the tap masks
        # below already exclude it -- this is belt & suspenders).
        y = jnp.where(idx < true_l, y, 0.0)

    # conv2: k-tap 1D conv, single channel, zero padding (k-1)//2, stride 1.
    # Non-negative lane rolls + boundary masks against the TRUE length, so both
    # the lane padding and the roll wrap-around are inert.
    pad = (ksize - 1) // 2
    acc = w2_ref[pad] * y                                  # center tap (d = 0)
    for j in range(ksize):
        d = j - pad                                        # tap reads y[l + d]
        if d == 0:
            continue
        tap = pltpu.roll(y, shift=(-d) % lp, axis=2)       # tap[l] = y[(l + d) % lp]
        mask = (idx <= (true_l - 1 - d)) if d > 0 else (idx >= -d)
        acc = acc + w2_ref[j] * jnp.where(mask, tap, 0.0)
    y = jnp.maximum(acc + scal_ref[1], 0.0)                # bias + bn2 shift, relu
    xk_ref[...] = y                                        # second output

    # conv3 (1x1, 1 -> C, BN3 scale folded into w3) + bn3 shift + residual + relu.
    out_ref[...] = jnp.maximum(
        w3_ref[...][None, :, :] * y + b3_ref[...][None, :, :] + x_ref[...], 0.0)


def _device_kind():
    try:
        return jax.devices()[0].device_kind.lower()
    except Exception:
        return ""


def _choose_nb(n, c, lp, budget_bytes, prefer_even_steps):
    """Largest batch-block dividing N whose REAL per-step VMEM footprint
    (double-buffered x block + out block + sublane-padded xk block) fits the
    budget.  Returns (nb, bytes_per_batch_element)."""
    c_pad = ((c + 7) // 8) * 8
    per_b = (2 * c_pad + 2 * c_pad + 2 * 8) * lp * 4       # x + out + xk, x2 buffers
    divisors = [d for d in range(1, n + 1) if n % d == 0]
    fitting = [d for d in divisors if d * per_b <= budget_bytes]
    if not fitting:
        # Even NB=1 exceeds the budget; caller raises vmem_limit to cover it.
        # TODO(synk): tile along L with a halo for this case instead.
        return 1, per_b
    nb = max(fitting)
    if prefer_even_steps and n >= 2:
        # v7x has 2 TensorCores per chip: prefer an even number of grid steps
        # so both get equal work, as long as blocks shrink at most 4x.
        balanced = [d for d in fitting if (n // d) % 2 == 0]
        if balanced and 4 * max(balanced) >= nb:
            nb = max(balanced)
    return nb, per_b


def bottleneck_forward(x, params):
    """x: (N, C, L) f32.  Returns (out (N, C, L), xk (N, 1, L))."""
    n, c, l = x.shape
    eps = 1e-5

    def fold_bn(g, b, m, v):
        s = g / jnp.sqrt(v + eps)
        return s, b - m * s

    s1, b1 = fold_bn(*params["bn1"])                  # width = 1
    s2, b2n = fold_bn(*params["bn2"])                 # width = 1
    s3, b3 = fold_bn(*params["bn3"])                  # (C,)

    # Host-side BN folding: scales go into the conv weights, shifts stay scalar.
    w1f = (params["w1"].reshape(c) * s1[0]).astype(jnp.float32)        # (C,)
    w2f = (params["w2"].reshape(KSIZE) * s2[0]).astype(jnp.float32)    # (K,)
    b2f = s2[0] * params["b2"][0] + b2n[0]
    w3f = (params["w3"].reshape(c) * s3).astype(jnp.float32)           # (C,)
    scalars = jnp.stack([b1[0], b2f]).astype(jnp.float32)              # SMEM pack

    # Lane-dense compute width (multiple of 128).  The Pallas blocks overhang
    # the true-L arrays, so no host-side pad and no post-kernel slice.
    lp = ((l + 127) // 128) * 128

    kind = _device_kind()
    is_v7 = "v7" in kind
    # v7x: 64 MiB physical VMEM per TC -> tighter budget; v5e/v6e: 128 MiB.
    budget = (24 << 20) if is_v7 else (40 << 20)       # per-step footprint budget
    vmem_limit = (48 << 20) if is_v7 else (80 << 20)

    nb, per_b = _choose_nb(n, c, lp, budget, prefer_even_steps=is_v7)
    footprint = nb * per_b + (8 << 20)                 # + headroom for weights/temps
    if footprint > vmem_limit:
        vmem_limit = footprint                         # last-resort (see L-tiling TODO)
    grid = (n // nb,)

    kernel = functools.partial(bottleneck_kernel, true_l=l, ksize=KSIZE)

    out, xk = pl.pallas_call(
        kernel,
        out_shape=(jax.ShapeDtypeStruct((n, c, l), jnp.float32),
                   jax.ShapeDtypeStruct((n, 1, l), jnp.float32)),
        grid_spec=pl.GridSpec(
            grid=grid,
            in_specs=[
                pl.BlockSpec((nb, c, lp), lambda i: (i, 0, 0)),          # x
                pl.BlockSpec((c, 1), lambda i: (0, 0)),                  # w1 (folded)
                pl.BlockSpec((c, 1), lambda i: (0, 0)),                  # w3 (folded)
                pl.BlockSpec((c, 1), lambda i: (0, 0)),                  # bn3 shift
                pl.BlockSpec(memory_space=pltpu.MemorySpace.SMEM),       # w2 taps
                pl.BlockSpec(memory_space=pltpu.MemorySpace.SMEM),       # scalars
            ],
            out_specs=(
                pl.BlockSpec((nb, c, lp), lambda i: (i, 0, 0)),          # out
                pl.BlockSpec((nb, 1, lp), lambda i: (i, 0, 0)),          # xk
            ),
        ),
        compiler_params=pltpu.CompilerParams(
            dimension_semantics=("parallel",),
            vmem_limit_bytes=int(vmem_limit)),
    )(x, w1f.reshape(c, 1), w3f.reshape(c, 1), b3.reshape(c, 1), w2f, scalars)
    return out, xk


def reference_forward(x, params):
    """Pure-JAX reference for correctness checking."""
    n, c, l = x.shape
    eps = 1e-5

    def fold_bn(g, b, m, v):
        s = g / jnp.sqrt(v + eps)
        return s, b - m * s

    s1, b1 = fold_bn(*params["bn1"])
    s2, b2n = fold_bn(*params["bn2"])
    s3, b3 = fold_bn(*params["bn3"])

    y = jnp.einsum("ncl,c->nl", x, params["w1"].reshape(c))[:, None, :]   # conv1
    y = jnp.maximum(y * s1[0] + b1[0], 0.0)                               # bn1+relu
    pad = (KSIZE - 1) // 2
    yp = jnp.pad(y, ((0, 0), (0, 0), (pad, pad)))
    w2 = params["w2"].reshape(KSIZE)
    y = sum(w2[j] * yp[:, :, j:j + l] for j in range(KSIZE)) + params["b2"][0]
    y = jnp.maximum(y * s2[0] + b2n[0], 0.0)                              # bn2+relu
    xk = y
    out = params["w3"].reshape(1, c, 1) * y                               # conv3
    out = out * s3.reshape(1, c, 1) + b3.reshape(1, c, 1)                 # bn3
    out = jnp.maximum(out + x, 0.0)                                       # +id, relu
    return out, xk


def make_params(key, inplanes):
    ks = jax.random.split(key, 12)

    def bn(k1, k2, k3, k4, n):
        return (jax.random.uniform(k1, (n,), jnp.float32, 0.5, 1.5),   # gamma
                0.1 * jax.random.normal(k2, (n,), jnp.float32),        # beta
                0.1 * jax.random.normal(k3, (n,), jnp.float32),        # running_mean
                jax.random.uniform(k4, (n,), jnp.float32, 0.5, 1.5))   # running_var

    return {
        "w1": 0.1 * jax.random.normal(ks[0], (1, inplanes, 1), jnp.float32),
        "w2": 0.3 * jax.random.normal(ks[1], (1, 1, KSIZE), jnp.float32),
        "b2": 0.1 * jax.random.normal(ks[2], (1,), jnp.float32),
        "w3": 0.1 * jax.random.normal(ks[3], (inplanes, 1, 1), jnp.float32),
        "bn1": bn(ks[4], ks[5], ks[6], ks[7], 1),
        "bn2": bn(ks[8], ks[9], ks[10], ks[11], 1),
        "bn3": bn(*jax.random.split(jax.random.fold_in(key, 99), 4), inplanes),
    }


if __name__ == "__main__":
    key = jax.random.PRNGKey(0)
    N, C, L = 2, 4, 16                     # batch, inplanes, sequence length
    kx, kp = jax.random.split(key)
    x = jax.random.normal(kx, (N, C, L), jnp.float32)
    params = make_params(kp, C)

    out, xk = bottleneck_forward(x, params)
    jax.block_until_ready(out)
    jax.block_until_ready(xk)

    out_ref, xk_ref = reference_forward(x, params)
    assert out.shape == (N, C, L) and xk.shape == (N, 1, L)
    assert jnp.allclose(out, out_ref, atol=1e-5, rtol=1e-5)
    assert jnp.allclose(xk, xk_ref, atol=1e-5, rtol=1e-5)
    print("KERNEL_OK")
</pallas_src>

<mosaic_0001>
module attributes {stable_mosaic.version = 11 : i64} {
  func.func @bottleneck_kernel(%arg0: i32, %arg1: memref<2x4x128xf32, #tpu.memory_space<vmem>>, %arg2: memref<4x1xf32, #tpu.memory_space<vmem>>, %arg3: memref<4x1xf32, #tpu.memory_space<vmem>>, %arg4: memref<4x1xf32, #tpu.memory_space<vmem>>, %arg5: memref<3xf32, #tpu.memory_space<smem>>, %arg6: memref<2xf32, #tpu.memory_space<smem>>, %arg7: memref<2x4x128xf32, #tpu.memory_space<vmem>>, %arg8: memref<2x1x128xf32, #tpu.memory_space<vmem>>) attributes {dimension_semantics = [#tpu.dimension_semantics<parallel>], iteration_bounds = array<i64: 1>, scalar_prefetch = 0 : i64, scratch_operands = 0 : i64, tpu.core_type = #tpu.core_type<tc>, window_params = [{transform_indices = @transform_0, window_bounds = array<i64: 2, 4, 128>}, {pipeline_mode = #tpu.pipeline_mode<synchronous>, transform_indices = @transform_1, window_bounds = array<i64: 4, 1>}, {pipeline_mode = #tpu.pipeline_mode<synchronous>, transform_indices = @transform_2, window_bounds = array<i64: 4, 1>}, {pipeline_mode = #tpu.pipeline_mode<synchronous>, transform_indices = @transform_3, window_bounds = array<i64: 4, 1>}, {transform_indices = @transform_4, window_bounds = array<i64: 3>}, {transform_indices = @transform_5, window_bounds = array<i64: 2>}, {transform_indices = @transform_6, window_bounds = array<i64: 2, 4, 128>}, {transform_indices = @transform_7, window_bounds = array<i64: 2, 1, 128>}]} {
    %c0 = arith.constant 0 : index
    %c0_0 = arith.constant 0 : index
    %c0_1 = arith.constant 0 : index
    %0 = vector.load %arg1[%c0, %c0_0, %c0_1] : memref<2x4x128xf32, #tpu.memory_space<vmem>>, vector<2x4x128xf32>
    %c0_2 = arith.constant 0 : index
    %c0_3 = arith.constant 0 : index
    %1 = vector.load %arg2[%c0_2, %c0_3] : memref<4x1xf32, #tpu.memory_space<vmem>>, vector<4x1xf32>
    %2 = vector.shape_cast %1 : vector<4x1xf32> to vector<1x4x1xf32>
    %3 = vector.broadcast %2 : vector<1x4x1xf32> to vector<2x4x128xf32>
    %4 = arith.mulf %0, %3 : vector<2x4x128xf32>
    %cst = arith.constant dense<0.000000e+00> : vector<2x128xf32>
    %5 = vector.multi_reduction <add>, %4, %cst [1] : vector<2x4x128xf32> to vector<2x128xf32>
    %6 = vector.shape_cast %5 : vector<2x128xf32> to vector<2x1x128xf32>
    %c0_4 = arith.constant 0 : index
    %7 = memref.load %arg6[%c0_4] : memref<2xf32, #tpu.memory_space<smem>>
    %8 = vector.broadcast %7 : f32 to vector<2x1x128xf32>
    %9 = arith.addf %6, %8 : vector<2x1x128xf32>
    %cst_5 = arith.constant 0.000000e+00 : f32
    %10 = vector.broadcast %cst_5 : f32 to vector<2x1x128xf32>
    %11 = arith.maximumf %9, %10 : vector<2x1x128xf32>
    %12 = tpu.iota {dimensions = array<i32: 2>} : vector<1x1x128xi32>
    %c16_i32 = arith.constant 16 : i32
    %13 = vector.broadcast %c16_i32 : i32 to vector<1x1x128xi32>
    %14 = arith.cmpi slt, %12, %13 : vector<1x1x128xi32>
    %cst_6 = arith.constant 0.000000e+00 : f32
    %15 = vector.shape_cast %14 : vector<1x1x128xi1> to vector<1x1x128xi1>
    %16 = vector.broadcast %15 : vector<1x1x128xi1> to vector<2x1x128xi1>
    %17 = vector.broadcast %cst_6 : f32 to vector<2x1x128xf32>
    %18 = arith.select %16, %11, %17 : vector<2x1x128xi1>, vector<2x1x128xf32>
    %c1 = arith.constant 1 : index
    %19 = memref.load %arg5[%c1] : memref<3xf32, #tpu.memory_space<smem>>
    %20 = vector.broadcast %19 : f32 to vector<2x1x128xf32>
    %21 = arith.mulf %20, %18 : vector<2x1x128xf32>
    %c1_i32 = arith.constant 1 : i32
    %22 = tpu.dynamic_rotate %18 by %c1_i32 dim 2 : vector<2x1x128xf32>, i32 -> vector<2x1x128xf32>
    %c1_i32_7 = arith.constant 1 : i32
    %23 = vector.broadcast %c1_i32_7 : i32 to vector<1x1x128xi32>
    %24 = arith.cmpi sge, %12, %23 : vector<1x1x128xi32>
    %c0_8 = arith.constant 0 : index
    %25 = memref.load %arg5[%c0_8] : memref<3xf32, #tpu.memory_space<smem>>
    %cst_9 = arith.constant 0.000000e+00 : f32
    %26 = vector.shape_cast %24 : vector<1x1x128xi1> to vector<1x1x128xi1>
    %27 = vector.broadcast %26 : vector<1x1x128xi1> to vector<2x1x128xi1>
    %28 = vector.broadcast %cst_9 : f32 to vector<2x1x128xf32>
    %29 = arith.select %27, %22, %28 : vector<2x1x128xi1>, vector<2x1x128xf32>
    %30 = vector.broadcast %25 : f32 to vector<2x1x128xf32>
    %31 = arith.mulf %30, %29 : vector<2x1x128xf32>
    %32 = arith.addf %21, %31 : vector<2x1x128xf32>
    %c127_i32 = arith.constant 127 : i32
    %33 = tpu.dynamic_rotate %18 by %c127_i32 dim 2 : vector<2x1x128xf32>, i32 -> vector<2x1x128xf32>
    %c14_i32 = arith.constant 14 : i32
    %34 = vector.broadcast %c14_i32 : i32 to vector<1x1x128xi32>
    %35 = arith.cmpi sle, %12, %34 : vector<1x1x128xi32>
    %c2 = arith.constant 2 : index
    %36 = memref.load %arg5[%c2] : memref<3xf32, #tpu.memory_space<smem>>
    %cst_10 = arith.constant 0.000000e+00 : f32
    %37 = vector.shape_cast %35 : vector<1x1x128xi1> to vector<1x1x128xi1>
    %38 = vector.broadcast %37 : vector<1x1x128xi1> to vector<2x1x128xi1>
    %39 = vector.broadcast %cst_10 : f32 to vector<2x1x128xf32>
    %40 = arith.select %38, %33, %39 : vector<2x1x128xi1>, vector<2x1x128xf32>
    %41 = vector.broadcast %36 : f32 to vector<2x1x128xf32>
    %42 = arith.mulf %41, %40 : vector<2x1x128xf32>
    %43 = arith.addf %32, %42 : vector<2x1x128xf32>
    %c1_11 = arith.constant 1 : index
    %44 = memref.load %arg6[%c1_11] : memref<2xf32, #tpu.memory_space<smem>>
    %45 = vector.broadcast %44 : f32 to vector<2x1x128xf32>
    %46 = arith.addf %43, %45 : vector<2x1x128xf32>
    %cst_12 = arith.constant 0.000000e+00 : f32
    %47 = vector.broadcast %cst_12 : f32 to vector<2x1x128xf32>
    %48 = arith.maximumf %46, %47 : vector<2x1x128xf32>
    %c0_13 = arith.constant 0 : index
    %c0_14 = arith.constant 0 : index
    %c0_15 = arith.constant 0 : index
    %49 = vector.load %arg8[%c0_13, %c0_14, %c0_15] : memref<2x1x128xf32, #tpu.memory_space<vmem>>, vector<2x1x128xf32>
    tpu.vector_store %arg8[%c0_13, %c0_14, %c0_15], %48 {strides = array<i32>} : memref<2x1x128xf32, #tpu.memory_space<vmem>>, vector<2x1x128xf32>,
    %c0_16 = arith.constant 0 : index
    %c0_17 = arith.constant 0 : index
    %50 = vector.load %arg3[%c0_16, %c0_17] : memref<4x1xf32, #tpu.memory_space<vmem>>, vector<4x1xf32>
    %51 = vector.shape_cast %50 : vector<4x1xf32> to vector<1x4x1xf32>
    %52 = vector.broadcast %51 : vector<1x4x1xf32> to vector<2x4x128xf32>
    %53 = vector.broadcast %48 : vector<2x1x128xf32> to vector<2x4x128xf32>
    %54 = arith.mulf %52, %53 : vector<2x4x128xf32>
    %c0_18 = arith.constant 0 : index
    %c0_19 = arith.constant 0 : index
    %55 = vector.load %arg4[%c0_18, %c0_19] : memref<4x1xf32, #tpu.memory_space<vmem>>, vector<4x1xf32>
    %56 = vector.shape_cast %55 : vector<4x1xf32> to vector<1x4x1xf32>
    %57 = vector.broadcast %56 : vector<1x4x1xf32> to vector<2x4x128xf32>
    %58 = arith.addf %54, %57 : vector<2x4x128xf32>
    %c0_20 = arith.constant 0 : index
    %c0_21 = arith.constant 0 : index
    %c0_22 = arith.constant 0 : index
    %59 = vector.load %arg1[%c0_20, %c0_21, %c0_22] : memref<2x4x128xf32, #tpu.memory_space<vmem>>, vector<2x4x128xf32>
    %60 = arith.addf %58, %59 : vector<2x4x128xf32>
    %cst_23 = arith.constant 0.000000e+00 : f32
    %61 = vector.broadcast %cst_23 : f32 to vector<2x4x128xf32>
    %62 = arith.maximumf %60, %61 : vector<2x4x128xf32>
    %c0_24 = arith.constant 0 : index
    %c0_25 = arith.constant 0 : index
    %c0_26 = arith.constant 0 : index
    %63 = vector.load %arg7[%c0_24, %c0_25, %c0_26] : memref<2x4x128xf32, #tpu.memory_space<vmem>>, vector<2x4x128xf32>
    tpu.vector_store %arg7[%c0_24, %c0_25, %c0_26], %62 {strides = array<i32>} : memref<2x4x128xf32, #tpu.memory_space<vmem>>, vector<2x4x128xf32>,
    return
  }
  func.func @transform_0(%arg0: i32) -> (i32, i32, i32) {
    %c0_i32 = arith.constant 0 : i32
    %c0_i32_0 = arith.constant 0 : i32
    %c0_i32_1 = arith.constant 0 : i32
    return %arg0, %c0_i32, %c0_i32_0 : i32, i32, i32
  }
  func.func @transform_1(%arg0: i32) -> (i32, i32) {
    %c0_i32 = arith.constant 0 : i32
    %c0_i32_0 = arith.constant 0 : i32
    %c0_i32_1 = arith.constant 0 : i32
    return %c0_i32, %c0_i32_0 : i32, i32
  }
  func.func @transform_2(%arg0: i32) -> (i32, i32) {
    %c0_i32 = arith.constant 0 : i32
    %c0_i32_0 = arith.constant 0 : i32
    %c0_i32_1 = arith.constant 0 : i32
    return %c0_i32, %c0_i32_0 : i32, i32
  }
  func.func @transform_3(%arg0: i32) -> (i32, i32) {
    %c0_i32 = arith.constant 0 : i32
    %c0_i32_0 = arith.constant 0 : i32
    %c0_i32_1 = arith.constant 0 : i32
    return %c0_i32, %c0_i32_0 : i32, i32
  }
  func.func @transform_4(%arg0: i32) -> i32 {
    %c0_i32 = arith.constant 0 : i32
    %c0_i32_0 = arith.constant 0 : i32
    return %c0_i32 : i32
  }
  func.func @transform_5(%arg0: i32) -> i32 {
    %c0_i32 = arith.constant 0 : i32
    %c0_i32_0 = arith.constant 0 : i32
    return %c0_i32 : i32
  }
  func.func @transform_6(%arg0: i32) -> (i32, i32, i32) {
    %c0_i32 = arith.constant 0 : i32
    %c0_i32_0 = arith.constant 0 : i32
    %c0_i32_1 = arith.constant 0 : i32
    return %arg0, %c0_i32, %c0_i32_0 : i32, i32, i32
  }
  func.func @transform_7(%arg0: i32) -> (i32, i32, i32) {
    %c0_i32 = arith.constant 0 : i32
    %c0_i32_0 = arith.constant 0 : i32
    %c0_i32_1 = arith.constant 0 : i32
    return %arg0, %c0_i32, %c0_i32_0 : i32, i32, i32
  }
}

</mosaic_0001>

<llo_original>
// kernel: tpu_custom_call.1
$region0: #{tpu_custom_call.1}
  #allocation0 [shape = 'u32[]', space=smem, size = 0x4, offset = 0x4, fixed_abs, tag = 'smem constant byte address 0x4 - core index']
  #allocation1 [shape = 'u32[144,128]{1,0:T(1,128)}', space=vmem, size = 0x12000, scoped, tag = 'internal scratch']
  %s0 = inlined_call_operand.hbm [shape: f32[2,4,16], index: 0, kind: input, shape index: {}]
  %s1 = inlined_call_operand.hbm [shape: f32[4,1], index: 1, kind: input, shape index: {}]
  %s2 = inlined_call_operand.hbm [shape: f32[4,1], index: 2, kind: input, shape index: {}]
  %s3 = inlined_call_operand.hbm [shape: f32[4,1], index: 3, kind: input, shape index: {}]
  %s4 = inlined_call_operand.hbm [shape: f32[3], index: 4, kind: input, shape index: {}]
  %s5 = inlined_call_operand.hbm [shape: f32[2], index: 5, kind: input, shape index: {}]
  %s6 = inlined_call_operand.hbm [shape: f32[2,4,16], index: 6, kind: output, shape index: {0}]
  %s7 = inlined_call_operand.hbm [shape: f32[2,1,16], index: 7, kind: output, shape index: {1}]
  %8 = xla_tuple %s6, %s7
  %s9 = sld [smem:[#allocation0]]
  $region66: #{tpu_custom_call.1} parent=0
    _
  %s11 = ssub.s32 1, %s9
  %s12 = scalar_select 0, %s11, %s9
  $region1: #{tpu_custom_call.1} parent=0
    #allocation2 [shape = 'u8[4096]{0}', space=vmem, size = 0x1000, scoped, tag = 'input window, operand 0, single buffered']
    #allocation3 [shape = 's32[1]{0}', space=sflag, size = 0x4, scoped, tag = 'scoped memory for tpu_custom_call.1']
    #allocation4 [shape = 's32[1]{0}', space=sflag, size = 0x4, scoped, tag = 'scoped memory for tpu_custom_call.1']
    #allocation5 [shape = 's32[1]{0}', space=sflag, size = 0x4, scoped, tag = 'scoped memory for tpu_custom_call.1']
    #allocation6 [shape = 'u8[2048]{0}', space=vmem, size = 0x800, scoped, tag = 'input window, operand 1, single buffered']
    #allocation7 [shape = 's32[1]{0}', space=sflag, size = 0x4, scoped, tag = 'scoped memory for tpu_custom_call.1']
    #allocation8 [shape = 'u8[2048]{0}', space=vmem, size = 0x800, scoped, tag = 'input window, operand 2, single buffered']
    #allocation9 [shape = 'u8[2048]{0}', space=vmem, size = 0x800, scoped, tag = 'input window, operand 3, single buffered']
    #allocation10 [shape = 's32[1]{0}', space=sflag, size = 0x4, scoped, tag = 'scoped memory for tpu_custom_call.1']
    #allocation11 [shape = 'u8[512]{0}', space=smem, size = 0x200, scoped, tag = 'input window, operand 4, single buffered']
    #allocation12 [shape = 'u8[512]{0}', space=smem, size = 0x200, scoped, tag = 'input window, operand 5, single buffered']
    #allocation13 [shape = 's32[1]{0}', space=sflag, size = 0x4, scoped, tag = 'scoped memory for tpu_custom_call.1']
    #allocation14 [shape = 'u8[4096]{0}', space=vmem, size = 0x1000, scoped, tag = 'output window, operand 0, single buffered']
    #allocation15 [shape = 'u8[1024]{0}', space=vmem, size = 0x400, scoped, tag = 'output window, operand 1, single buffered']
    #allocation16 [shape = 's32[1]{0}', space=sflag, size = 0x4, scoped, tag = 'scoped memory for tpu_custom_call.1']
    %13 = vsyncpa [#allocation3], 0
    %14 = vsyncpa [#allocation7], 0
    %15 = vsyncpa [#allocation10], 0
    %16 = vsyncpa [#allocation5], 0
    %17 = vsyncpa [#allocation13], 0
    %18 = vsyncpa [#allocation4], 0
    %19 = vsyncpa [#allocation16], 0
    // Predicated region
    $region2: #{tpu_custom_call.1} parent=1 // pred_check
      _
    $region3: #{tpu_custom_call.1} parent=1 // pred_check_branch
      %21 = sbr.rel (0) target = $region5
    $region4: #{tpu_custom_call.1} parent=1 // pred_region
      %s23 = ssub.s32 128, 128
      %24 = vsyncadd [#allocation3], %s23
      %s25 = sshll.u32 [#allocation2], 4
      %s26 = int_to_ptr.vmem [resolvable:$true] %s25
      %31 = dma.hbm_to_vmem [thread:$0]  %s0, 128, %s26, [#allocation3], 64, 64, 4
    $region5: #{tpu_custom_call.1} parent=1 // pred_fallthru
      _
    // Predicated region
    $region6: #{tpu_custom_call.1} parent=1 // pred_check
      _
    $region7: #{tpu_custom_call.1} parent=1 // pred_check_branch
      %33 = sbr.rel (0) target = $region9
    $region8: #{tpu_custom_call.1} parent=1 // pred_region
      %s35 = ssub.s32 64, 64
      %36 = vsyncadd [#allocation7], %s35
      %s38 = sshll.u32 [#allocation6], 4
      %s39 = int_to_ptr.vmem [resolvable:$true] %s38
      %41 = dma.hbm_to_vmem [thread:$0]  %s1, 64, %s39, [#allocation7]
    $region9: #{tpu_custom_call.1} parent=1 // pred_fallthru
      _
    // Predicated region
    $region10: #{tpu_custom_call.1} parent=1 // pred_check
      _
    $region11: #{tpu_custom_call.1} parent=1 // pred_check_branch
      %43 = sbr.rel (0) target = $region13
    $region12: #{tpu_custom_call.1} parent=1 // pred_region
      %s45 = ssub.s32 64, 64
      %46 = vsyncadd [#allocation7], %s45
      %s48 = sshll.u32 [#allocation8], 4
      %s49 = int_to_ptr.vmem [resolvable:$true] %s48
      %51 = dma.hbm_to_vmem [thread:$0]  %s2, 64, %s49, [#allocation7]
    $region13: #{tpu_custom_call.1} parent=1 // pred_fallthru
      _
    // Predicated region
    $region14: #{tpu_custom_call.1} parent=1 // pred_check
      _
    $region15: #{tpu_custom_call.1} parent=1 // pred_check_branch
      %53 = sbr.rel (0) target = $region17
    $region16: #{tpu_custom_call.1} parent=1 // pred_region
      %s55 = ssub.s32 64, 64
      %56 = vsyncadd [#allocation10], %s55
      %s58 = sshll.u32 [#allocation9], 4
      %s59 = int_to_ptr.vmem [resolvable:$true] %s58
      %61 = dma.hbm_to_vmem [thread:$0]  %s3, 64, %s59, [#allocation10]
    $region17: #{tpu_custom_call.1} parent=1 // pred_fallthru
      _
    // Predicated region
    $region18: #{tpu_custom_call.1} parent=1 // pred_check
      _
    $region19: #{tpu_custom_call.1} parent=1 // pred_check_branch
      %63 = sbr.rel (0) target = $region21
    $region20: #{tpu_custom_call.1} parent=1 // pred_region
      %s65 = ssub.s32 16, 16
      %66 = vsyncadd [#allocation5], %s65
      %69 = dma.hbm_to_smem %s4, 16, [#allocation11], [#allocation5]
    $region21: #{tpu_custom_call.1} parent=1 // pred_fallthru
      _
    // Predicated region
    $region22: #{tpu_custom_call.1} parent=1 // pred_check
      _
    $region23: #{tpu_custom_call.1} parent=1 // pred_check_branch
      %71 = sbr.rel (0) target = $region25
    $region24: #{tpu_custom_call.1} parent=1 // pred_region
      %s73 = ssub.s32 16, 16
      %74 = vsyncadd [#allocation13], %s73
      %77 = dma.hbm_to_smem %s5, 16, [#allocation12], [#allocation13]
    $region25: #{tpu_custom_call.1} parent=1 // pred_fallthru
      _
    // Predicated region
    $region26: #{tpu_custom_call.1} parent=1 // pred_check
      _
    $region27: #{tpu_custom_call.1} parent=1 // pred_check_branch
      %79 = sbr.rel (0) target = $region29
    $region28: #{tpu_custom_call.1} parent=1 // pred_region
      %80 = dma.done [#allocation3], 128
    $region29: #{tpu_custom_call.1} parent=1 // pred_fallthru
      _
    // Predicated region
    $region30: #{tpu_custom_call.1} parent=1 // pred_check
      _
    $region31: #{tpu_custom_call.1} parent=1 // pred_check_branch
      %82 = sbr.rel (0) target = $region33
    $region32: #{tpu_custom_call.1} parent=1 // pred_region
      %83 = dma.done [#allocation7], 64
    $region33: #{tpu_custom_call.1} parent=1 // pred_fallthru
      _
    // Predicated region
    $region34: #{tpu_custom_call.1} parent=1 // pred_check
      _
    $region35: #{tpu_custom_call.1} parent=1 // pred_check_branch
      %85 = sbr.rel (0) target = $region37
    $region36: #{tpu_custom_call.1} parent=1 // pred_region
      %86 = dma.done [#allocation7], 64
    $region37: #{tpu_custom_call.1} parent=1 // pred_fallthru
      _
    // Predicated region
    $region38: #{tpu_custom_call.1} parent=1 // pred_check
      _
    $region39: #{tpu_custom_call.1} parent=1 // pred_check_branch
      %88 = sbr.rel (0) target = $region41
    $region40: #{tpu_custom_call.1} parent=1 // pred_region
      %89 = dma.done [#allocation10], 64
    $region41: #{tpu_custom_call.1} parent=1 // pred_fallthru
      _
    // Predicated region
    $region42: #{tpu_custom_call.1} parent=1 // pred_check
      _
    $region43: #{tpu_custom_call.1} parent=1 // pred_check_branch
      %91 = sbr.rel (0) target = $region45
    $region44: #{tpu_custom_call.1} parent=1 // pred_region
      %92 = dma.done [#allocation5], 16
    $region45: #{tpu_custom_call.1} parent=1 // pred_fallthru
      _
    // Predicated region
    $region46: #{tpu_custom_call.1} parent=1 // pred_check
      _
    $region47: #{tpu_custom_call.1} parent=1 // pred_check_branch
      %94 = sbr.rel (0) target = $region49
    $region48: #{tpu_custom_call.1} parent=1 // pred_region
      %95 = dma.done [#allocation13], 16
    $region49: #{tpu_custom_call.1} parent=1 // pred_fallthru
      _
    %96 = sfence
    %v97 = vld [vmem:[#allocation2] sm:$0xf]
    %v98 = vld [vmem:[#allocation2 + $0x4] sm:$0xf]
    %v99 = vld [vmem:[#allocation6] sm:$0xf]
    %101 = vset.pattern.permute.xlu0 0
    %102 = vperm.xlu0 %101, %v99
    %v103 = vpop.permute.xlu0 %102
    %v105 = vmul.f32 %v97, %v103
    %v106 = vmul.f32 %v98, %v103
    %vm107 = vcmask 1043456
    %v108 = vsel %vm107, %v105, 0.0
    %v109 = vrot.slane %v108, 4
    %v110 = vadd.f32 %v108, %v109
    %v111 = vrot.slane %v110, 2
    %v112 = vadd.f32 %v110, %v111
    %v113 = vrot.slane %v112, 1
    %v114 = vadd.f32 %v112, %v113
    %v115 = vsel %vm107, %v106, 0.0
    %v116 = vrot.slane %v115, 4
    %v117 = vadd.f32 %v115, %v116
    %v118 = vrot.slane %v117, 2
    %v119 = vadd.f32 %v117, %v118
    %v120 = vrot.slane %v119, 1
    %v121 = vadd.f32 %v119, %v120
    %s122 = sld [smem:[#allocation12]]
    %v123 = vstv %s122
    %v124 = vadd.f32 %v114, %v123
    %v125 = vadd.f32 %v121, %v123
    %v126 = vmax.f32 %v124, 0.0
    %v127 = vmax.f32 %v125, 0.0
    %v128 = vlaneseq
    %v129 = vand.u32 %v128, 127
    %vm130 = vcmp.lt.s32.totalorder %v129, 16
    %v131 = vsel %vm130, 1, 0
    %vm132 = vcmp.eq.s32.totalorder %v131, 1
    %v133 = vsel %vm132, %v126, 0.0
    %v134 = vsel %vm132, %v127, 0.0
    %s135 = sld [smem:[#allocation11 + $0x1]]
    %v136 = vstv %s135
    %v137 = vmul.f32 %v136, %v133
    %v138 = vmul.f32 %v136, %v134
    %139 = vrot.lane.b32.xlu0 %v133, 1
    %v140 = vpop.permute.xlu0 %139
    %141 = vrot.lane.b32.xlu0 %v134, 1
    %v142 = vpop.permute.xlu0 %141
    %vm143 = vcmp.ge.s32.totalorder %v129, 1
    %s144 = sld [smem:[#allocation11]]
    %v145 = vsel %vm143, 1, 0
    %vm146 = vcmp.eq.s32.totalorder %v145, 1
    %v147 = vsel %vm146, %v140, 0.0
    %v148 = vsel %vm146, %v142, 0.0
    %v149 = vstv %s144
    %v150 = vmul.f32 %v149, %v147
    %v151 = vmul.f32 %v149, %v148
    %v152 = vadd.f32 %v137, %v150
    %v153 = vadd.f32 %v138, %v151
    %154 = vrot.lane.b32.xlu0 %v133, 127
    %v155 = vpop.permute.xlu0 %154
    %156 = vrot.lane.b32.xlu0 %v134, 127
    %v157 = vpop.permute.xlu0 %156
    %vm158 = vcmp.le.s32.totalorder %v129, 14
    %s159 = sld [smem:[#allocation11 + $0x2]]
    %v160 = vsel %vm158, 1, 0
    %vm161 = vcmp.eq.s32.totalorder %v160, 1
    %v162 = vsel %vm161, %v155, 0.0
    %v163 = vsel %vm161, %v157, 0.0
    %v164 = vstv %s159
    %v165 = vmul.f32 %v164, %v162
    %v166 = vmul.f32 %v164, %v163
    %v167 = vadd.f32 %v152, %v165
    %v168 = vadd.f32 %v153, %v166
    %s169 = sld [smem:[#allocation12 + $0x1]]
    %v170 = vstv %s169
    %v171 = vadd.f32 %v167, %v170
    %v172 = vadd.f32 %v168, %v170
    %v173 = vmax.f32 %v171, 0.0
    %v174 = vmax.f32 %v172, 0.0
    %175 = vst [vmem:[#allocation15] sm:$0x1] %v173
    %176 = vst [vmem:[#allocation15 + $0x1] sm:$0x1] %v174
    %v177 = vld [vmem:[#allocation8] sm:$0xf]
    %179 = vset.pattern.permute.xlu0 0
    %180 = vperm.xlu0 %179, %v177
    %v181 = vpop.permute.xlu0 %180
    %v183 = vlaneseq
    %v184 = vshrl.u32 %v183, 7
    %v185 = vsub.s32 0, %v184
    %v186 = vrot.slane %v173, %v185
    %v187 = vlaneseq
    %v188 = vshrl.u32 %v187, 7
    %v189 = vsub.s32 0, %v188
    %v190 = vrot.slane %v174, %v189
    %v191 = vmul.f32 %v181, %v186
    %v192 = vmul.f32 %v181, %v190
    %v193 = vld [vmem:[#allocation9] sm:$0xf]
    %195 = vset.pattern.permute.xlu0 0
    %196 = vperm.xlu0 %195, %v193
    %v197 = vpop.permute.xlu0 %196
    %v199 = vadd.f32 %v191, %v197
    %v200 = vadd.f32 %v192, %v197
    %v201 = vld [vmem:[#allocation2] sm:$0xf]
    %v202 = vld [vmem:[#allocation2 + $0x4] sm:$0xf]
    %v203 = vadd.f32 %v199, %v201
    %v204 = vadd.f32 %v200, %v202
    %v205 = vmax.f32 %v203, 0.0
    %v206 = vmax.f32 %v204, 0.0
    %207 = vst [vmem:[#allocation14] sm:$0xf] %v205
    %208 = vst [vmem:[#allocation14 + $0x4] sm:$0xf] %v206
    // Predicated region
    $region50: #{tpu_custom_call.1} parent=1 // pred_check
      _
    $region51: #{tpu_custom_call.1} parent=1 // pred_check_branch
      %210 = sbr.rel (0) target = $region53
    $region52: #{tpu_custom_call.1} parent=1 // pred_region
      %s212 = ssub.s32 128, 128
      %213 = vsyncadd [#allocation4], %s212
      %s214 = sshll.u32 [#allocation14], 4
      %s215 = int_to_ptr.vmem [resolvable:$true] %s214
      %220 = dma.vmem_to_hbm [thread:$0]  %s215, 128, %s6, [#allocation4], 64, 64, 4
    $region53: #{tpu_custom_call.1} parent=1 // pred_fallthru
      _
    // Predicated region
    $region54: #{tpu_custom_call.1} parent=1 // pred_check
      _
    $region55: #{tpu_custom_call.1} parent=1 // pred_check_branch
      %222 = sbr.rel (0) target = $region57
    $region56: #{tpu_custom_call.1} parent=1 // pred_region
      %s224 = ssub.s32 32, 32
      %225 = vsyncadd [#allocation16], %s224
      %s226 = sshll.u32 [#allocation15], 4
      %s227 = int_to_ptr.vmem [resolvable:$true] %s226
      %232 = dma.vmem_to_hbm [thread:$0]  %s227, 32, %s7, [#allocation16], 16, 16, 1
    $region57: #{tpu_custom_call.1} parent=1 // pred_fallthru
      _
    // Predicated region
    $region58: #{tpu_custom_call.1} parent=1 // pred_check
      _
    $region59: #{tpu_custom_call.1} parent=1 // pred_check_branch
      %234 = sbr.rel (0) target = $region61
    $region60: #{tpu_custom_call.1} parent=1 // pred_region
      %235 = dma.done [#allocation4], 128
    $region61: #{tpu_custom_call.1} parent=1 // pred_fallthru
      _
    // Predicated region
    $region62: #{tpu_custom_call.1} parent=1 // pred_check
      _
    $region63: #{tpu_custom_call.1} parent=1 // pred_check_branch
      %237 = sbr.rel (0) target = $region65
    $region64: #{tpu_custom_call.1} parent=1 // pred_region
      %238 = dma.done [#allocation16], 32
    $region65: #{tpu_custom_call.1} parent=1 // pred_fallthru
      _
    %239 = vsyncpa [#allocation3], 1
    %240 = vsyncpa [#allocation7], 1
    %241 = vsyncpa [#allocation10], 1
    %242 = vsyncpa [#allocation4], 1
    %243 = vsyncpa [#allocation16], 1
    %244 = vsyncpa [#allocation5], 1
    %245 = vsyncpa [#allocation13], 1

</llo_original>
